<compile_context>
chip_gen: v6e
topology: v6e:2x2x1
jax: 0.10.0
libtpu: 0.0.40
codegen_flags: <defaults>
</compile_context>

<pallas_src>
import jax
import jax.numpy as jnp
from jax.experimental import pallas as pl
from jax.experimental.pallas import tpu as pltpu

ALPHA = 1.0  # photon-count normalization of DirectPoisson prep (deterministic constant)

_DEFAULT_VMEM_LIMIT = 32 << 20  # Mosaic's default scoped-VMEM limit on v6e/v7x


def _round_up(a, b):
    return ((a + b - 1) // b) * b


def _device_vmem_bytes():
    try:
        return int(pltpu.get_tpu_info().vmem_capacity_bytes)
    except Exception:
        return 64 << 20  # conservative: v7x per-TensorCore VMEM


def _spec(block_shape, index_map, *, buffers=2):
    """BlockSpec with explicit buffer count; Buffered(1) for never-refetched weights."""
    if buffers == 2:
        return pl.BlockSpec(block_shape, index_map)
    try:
        return pl.BlockSpec(block_shape, index_map, pipeline_mode=pl.Buffered(buffers))
    except TypeError:  # older jax without pipeline_mode= -> fall back to default buffering
        return pl.BlockSpec(block_shape, index_map)


# ----------------------------- Kernels -------------------------------------

def _fused_w_kernel(x_ref, w_ref, o_ref):
    # Single-matmul path: x_ref (bm, N), w_ref (N, tn) column stripe, o_ref (bm, tn).
    o_ref[...] = (jnp.dot(x_ref[...], w_ref[...],
                          preferred_element_type=jnp.float32) - 1.0).astype(o_ref.dtype)


def _two_matmul_kernel(x_ref, ht_ref, hpt_ref, o_ref, m_ref):
    # Two-matmul path: x_ref (bm, N), ht_ref (N, M_pad)=H^T, hpt_ref (M_pad, N)=(2/a)*pinv(H)^T.
    # m_ref (bm, M_pad) f32 VMEM scratch stages the measurement intermediate.
    m_ref[...] = jnp.dot(x_ref[...], ht_ref[...], preferred_element_type=jnp.float32)
    o_ref[...] = (jnp.dot(m_ref[...].astype(hpt_ref.dtype), hpt_ref[...],
                          preferred_element_type=jnp.float32) - 1.0).astype(o_ref.dtype)


# ----------------------------- Wrapper --------------------------------------

def make_pinvnet_rescaled(H, H_pinv, *, alpha=ALPHA, weight_dtype=jnp.bfloat16,
                          out_dtype=jnp.float32, bm_max=256, tn_target=1024,
                          resident_weight_budget=24 << 20):
    """Precompute fused weights once; return forward(x) for (B, C, Hh, Ww) inputs.

    weight_dtype=bfloat16 (default) uses the MXU-native path with f32 accumulation;
    pass jnp.float32 for exact parity with the PyTorch module.
    """
    H = jnp.asarray(H, jnp.float32)
    H_pinv = jnp.asarray(H_pinv, jnp.float32)
    M, N = H.shape
    scale = 2.0 / alpha
    w_item = jnp.dtype(weight_dtype).itemsize
    out_item = jnp.dtype(out_dtype).itemsize

    # Pad the measurement dim to a multiple of 128 (exact: zero rows of H / zero columns
    # of pinv(H) contribute nothing) so both matmuls of the two-matmul path keep full
    # MXU K/lane fill. Only take the two-matmul path when it actually saves FLOPs+bytes.
    M_pad = max(128, _round_up(M, 128))
    use_two_matmul = (2 * M_pad < N)

    if use_two_matmul:
        Ht = jnp.zeros((N, M_pad), jnp.float32).at[:, :M].set(H.T)
        Hpt = jnp.zeros((M_pad, N), jnp.float32).at[:M, :].set(scale * H_pinv.T)
        weights = (Ht.astype(weight_dtype), Hpt.astype(weight_dtype))
        weight_bytes = 2 * N * M_pad * w_item
        tn, N_cols, n_col = N, N, 1  # no column tiling needed: weights are small by construction
        # TODO(synk): add a column-tiled two-matmul variant (rows outer, pl.when(col==0)
        # to compute m once) for extreme N where even 2*N*M_pad exceeds VMEM.
    else:
        W = (H.T @ (scale * H_pinv.T)).astype(weight_dtype)  # (N, N) rank-M projection (scaled)
        if N * N * w_item <= resident_weight_budget:
            tn, N_cols = N, N                                 # fully VMEM-resident, Buffered(1)
        else:
            tn = min(_round_up(N, 128), tn_target)            # column-striped weight
            N_cols = _round_up(N, tn)
        if N_cols != N:
            W = jnp.pad(W, ((0, 0), (0, N_cols - N)))         # zero cols -> sliced off below
        weights = (W,)
        weight_bytes = N * N_cols * w_item
        n_col = N_cols // tn

    dev_cap = _device_vmem_bytes()

    def forward(x):
        B, C, Hh, Ww = x.shape
        assert Hh * Ww == N, "spatial dims must match the measurement matrix"
        BC = B * C
        x_flat = x.reshape(BC, N).astype(weight_dtype)

        # Pad rows to a full sublane multiple -> unmasked stores, filled MXU rows.
        bm = min(bm_max, _round_up(BC, 8))
        BC_pad = _round_up(BC, bm)
        if BC_pad != BC:
            x_flat = jnp.pad(x_flat, ((0, BC_pad - BC), (0, 0)))
        n_row = BC_pad // bm

        x_tile_b = 2 * bm * N * w_item  # double-buffered input tile

        if use_two_matmul:
            out_tile_b = 2 * bm * N * out_item
            scratch_b = bm * M_pad * 4
            need = weight_bytes + x_tile_b + out_tile_b + scratch_b + (2 << 20)
            flops = 4 * BC_pad * N * M_pad
            out_cols = N
        else:
            w_buffers = 1 if n_col == 1 else 2
            out_tile_b = 2 * bm * tn * out_item
            need = w_buffers * N * tn * w_item + x_tile_b + out_tile_b + (2 << 20)
            flops = 2 * BC_pad * N * N_cols
            out_cols = N_cols

        vmem_limit = None
        if need > _DEFAULT_VMEM_LIMIT:
            vmem_limit = int(min(need + (4 << 20), dev_cap - (4 << 20)))

        cost = pl.CostEstimate(
            flops=int(flops), transcendentals=0,
            bytes_accessed=int(BC_pad * N * w_item + weight_bytes + BC_pad * out_cols * out_item))

        if use_two_matmul:
            cp = pltpu.CompilerParams(dimension_semantics=("parallel",),
                                      vmem_limit_bytes=vmem_limit)
            out_flat = pl.pallas_call(
                _two_matmul_kernel,
                out_shape=jax.ShapeDtypeStruct((BC_pad, N), out_dtype),
                grid=(n_row,),
                in_specs=[
                    pl.BlockSpec((bm, N), lambda i: (i, 0)),
                    _spec((N, M_pad), lambda i: (0, 0), buffers=1),   # resident, single-buffered
                    _spec((M_pad, N), lambda i: (0, 0), buffers=1),   # resident, single-buffered
                ],
                out_specs=pl.BlockSpec((bm, N), lambda i: (i, 0)),
                scratch_shapes=[pltpu.VMEM((bm, M_pad), jnp.float32)],
                compiler_params=cp,
                cost_estimate=cost,
            )(x_flat, *weights)
        else:
            # Columns outer ("parallel": v7x cores split column stripes -> each core loads
            # only its half of the weight), rows inner (weight stripe loaded once, small x
            # tiles re-streamed).
            cp = pltpu.CompilerParams(dimension_semantics=("parallel", "parallel"),
                                      vmem_limit_bytes=vmem_limit)
            out_flat = pl.pallas_call(
                _fused_w_kernel,
                out_shape=jax.ShapeDtypeStruct((BC_pad, N_cols), out_dtype),
                grid=(n_col, n_row),
                in_specs=[
                    pl.BlockSpec((bm, N), lambda j, i: (i, 0)),
                    _spec((N, tn), lambda j, i: (0, j), buffers=w_buffers),
                ],
                out_specs=pl.BlockSpec((bm, tn), lambda j, i: (i, j)),
                compiler_params=cp,
                cost_estimate=cost,
            )(x_flat, *weights)

        return out_flat[:BC, :N].reshape(B, C, Hh, Ww).astype(jnp.float32)

    return jax.jit(forward)


# ----------------------------- Reference & test ------------------------------

def _reference(x, H, H_pinv, alpha=ALPHA):
    # Original (non-fused) PinvNet arithmetic, followed by the *2 - 1 rescale.
    B, C, Hh, Ww = x.shape
    N = Hh * Ww
    xf = x.reshape(B * C, N).astype(jnp.float32)
    x01 = (xf + 1.0) / 2.0
    y = x01 @ H.T
    m = (2.0 * y - jnp.sum(H, axis=1)[None, :]) / alpha
    z = m @ H_pinv.T
    return (z * 2.0 - 1.0).reshape(B, C, Hh, Ww)


if __name__ == "__main__":
    key = jax.random.PRNGKey(0)
    k_x1, k_x2, k_h1, k_h2 = jax.random.split(key, 4)

    ok = True

    # Case 1: 16x16 images, M = N/2 -> fused single-W path (resident weight, Buffered(1)).
    B1, C1, Hh1, Ww1 = 2, 4, 16, 16
    N1, M1 = Hh1 * Ww1, 128
    x1 = jax.random.uniform(k_x1, (B1, C1, Hh1, Ww1), jnp.float32, -1.0, 1.0)
    H1 = jax.random.normal(k_h1, (M1, N1), jnp.float32) / jnp.sqrt(N1)
    H1_pinv = jnp.linalg.pinv(H1)          # one-time parameter setup (host / plain JAX)
    ref1 = _reference(x1, H1, H1_pinv)

    out1 = jax.block_until_ready(make_pinvnet_rescaled(H1, H1_pinv)(x1))            # bf16 weights
    ok &= bool(jnp.max(jnp.abs(out1 - ref1)) < 3e-2)
    out1f = jax.block_until_ready(
        make_pinvnet_rescaled(H1, H1_pinv, weight_dtype=jnp.float32)(x1))            # exact path
    ok &= bool(jnp.allclose(out1f, ref1, atol=1e-4, rtol=1e-4))

    # Case 2: 32x32 images, M=100 (padded to 128) -> two-matmul path with VMEM-staged m.
    B2, C2, Hh2, Ww2 = 2, 1, 32, 32
    N2, M2 = Hh2 * Ww2, 100
    x2 = jax.random.uniform(k_x2, (B2, C2, Hh2, Ww2), jnp.float32, -1.0, 1.0)
    H2 = jax.random.normal(k_h2, (M2, N2), jnp.float32) / jnp.sqrt(N2)
    H2_pinv = jnp.linalg.pinv(H2)
    ref2 = _reference(x2, H2, H2_pinv)

    out2 = jax.block_until_ready(make_pinvnet_rescaled(H2, H2_pinv)(x2))             # bf16 weights
    ok &= bool(jnp.max(jnp.abs(out2 - ref2)) < 3e-2)
    out2f = jax.block_until_ready(
        make_pinvnet_rescaled(H2, H2_pinv, weight_dtype=jnp.float32)(x2))             # exact path
    ok &= bool(jnp.allclose(out2f, ref2, atol=1e-4, rtol=1e-4))

    assert out1.shape == x1.shape and out2.shape == x2.shape
    assert ok, "mismatch vs reference"
    print("KERNEL_OK")
</pallas_src>

<mosaic_0001>
module attributes {stable_mosaic.version = 11 : i64} {
  func.func @_fused_w_kernel(%arg0: i32, %arg1: i32, %arg2: memref<8x256xbf16, #tpu.memory_space<vmem>>, %arg3: memref<256x256xbf16, #tpu.memory_space<vmem>>, %arg4: memref<8x256xf32, #tpu.memory_space<vmem>>) attributes {dimension_semantics = [#tpu.dimension_semantics<parallel>, #tpu.dimension_semantics<parallel>], iteration_bounds = array<i64: 1, 1>, scalar_prefetch = 0 : i64, scratch_operands = 0 : i64, tpu.core_type = #tpu.core_type<tc>, window_params = [{transform_indices = @transform_0, window_bounds = array<i64: 8, 256>}, {pipeline_mode = #tpu.pipeline_mode<synchronous>, transform_indices = @transform_1, window_bounds = array<i64: 256, 256>}, {transform_indices = @transform_2, window_bounds = array<i64: 8, 256>}]} {
    %c0 = arith.constant 0 : index
    %c0_0 = arith.constant 0 : index
    %0 = vector.load %arg2[%c0, %c0_0] : memref<8x256xbf16, #tpu.memory_space<vmem>>, vector<8x256xbf16>
    %c0_1 = arith.constant 0 : index
    %c0_2 = arith.constant 0 : index
    %1 = vector.load %arg3[%c0_1, %c0_2] : memref<256x256xbf16, #tpu.memory_space<vmem>>, vector<256x256xbf16>
    %cst = arith.constant dense<0.000000e+00> : vector<8x256xf32>
    %2 = tpu.matmul %0, %1, %cst {dimension_numbers = #tpu.dot_dimension_numbers<[1], [0], [0], [1], [0, 0, 1, 1], [], []>} : vector<8x256xbf16>, vector<256x256xbf16>, vector<8x256xf32> -> vector<8x256xf32>
    %cst_3 = arith.constant 1.000000e+00 : f32
    %3 = vector.broadcast %cst_3 : f32 to vector<8x256xf32>
    %4 = arith.subf %2, %3 : vector<8x256xf32>
    %c0_4 = arith.constant 0 : index
    %c0_5 = arith.constant 0 : index
    %5 = vector.load %arg4[%c0_4, %c0_5] : memref<8x256xf32, #tpu.memory_space<vmem>>, vector<8x256xf32>
    tpu.vector_store %arg4[%c0_4, %c0_5], %4 {strides = array<i32>} : memref<8x256xf32, #tpu.memory_space<vmem>>, vector<8x256xf32>,
    return
  }
  func.func @transform_0(%arg0: i32, %arg1: i32) -> (i32, i32) {
    %c0_i32 = arith.constant 0 : i32
    %c0_i32_0 = arith.constant 0 : i32
    return %arg1, %c0_i32 : i32, i32
  }
  func.func @transform_1(%arg0: i32, %arg1: i32) -> (i32, i32) {
    %c0_i32 = arith.constant 0 : i32
    %c0_i32_0 = arith.constant 0 : i32
    return %c0_i32, %arg0 : i32, i32
  }
  func.func @transform_2(%arg0: i32, %arg1: i32) -> (i32, i32) {
    %c0_i32 = arith.constant 0 : i32
    return %arg1, %arg0 : i32, i32
  }
}

</mosaic_0001>

<llo_original>
// kernel: forward.1
$region0: #{forward.1}
  #allocation0 [shape = 'u32[]', space=smem, size = 0x4, offset = 0x4, fixed_abs, tag = 'smem constant byte address 0x4 - core index']
  #allocation1 [shape = 'u32[144,128]{1,0:T(1,128)}', space=vmem, size = 0x12000, scoped, tag = 'internal scratch']
  %s0 = inlined_call_operand.vmem [shape: bf16[8,256], index: 0, kind: input, shape index: {}]
  %s1 = inlined_call_operand.vmem [shape: bf16[256,256], index: 1, kind: input, shape index: {}]
  %s2 = inlined_call_operand.vmem [shape: f32[8,256], index: 2, kind: output, shape index: {}]
  %s3 = sld [smem:[#allocation0]]
  $region18: #{forward.1} parent=0
    _
  %s5 = ssub.s32 1, %s3
  %s6 = scalar_select 0, %s5, %s3
  // Predicated region
  $region2: #{forward.1} parent=0 // pred_check
    _
  $region3: #{forward.1} parent=0 // pred_check_branch
    %8 = sbr.rel (0) target = $region5
  $region4: #{forward.1} parent=0 // pred_region
    _
  $region5: #{forward.1} parent=0 // pred_fallthru
    _
  // Predicated region
  $region6: #{forward.1} parent=0 // pred_check
    _
  $region7: #{forward.1} parent=0 // pred_check_branch
    %10 = sbr.rel (0) target = $region9
  $region8: #{forward.1} parent=0 // pred_region
    _
  $region9: #{forward.1} parent=0 // pred_fallthru
    _
  %v11 = vld [vmem:[%s0] sm:$0xff]
  %v12 = vld [vmem:[%s1] sm:$0xff]
  %v13 = vld [vmem:[%s1 + $0x8] sm:$0xff]
  %v14 = vld [vmem:[%s1 + $0x10] sm:$0xff]
  %v15 = vld [vmem:[%s1 + $0x18] sm:$0xff]
  %v16 = vld [vmem:[%s1 + $0x20] sm:$0xff]
  %v17 = vld [vmem:[%s1 + $0x28] sm:$0xff]
  %v18 = vld [vmem:[%s1 + $0x30] sm:$0xff]
  %v19 = vld [vmem:[%s1 + $0x38] sm:$0xff]
  %v20 = vld [vmem:[%s1 + $0x40] sm:$0xff]
  %v21 = vld [vmem:[%s1 + $0x48] sm:$0xff]
  %v22 = vld [vmem:[%s1 + $0x50] sm:$0xff]
  %v23 = vld [vmem:[%s1 + $0x58] sm:$0xff]
  %v24 = vld [vmem:[%s1 + $0x60] sm:$0xff]
  %v25 = vld [vmem:[%s1 + $0x68] sm:$0xff]
  %v26 = vld [vmem:[%s1 + $0x70] sm:$0xff]
  %v27 = vld [vmem:[%s1 + $0x78] sm:$0xff]
  %v28 = vld [vmem:[%s1 + $0x80] sm:$0xff]
  %v29 = vld [vmem:[%s1 + $0x88] sm:$0xff]
  %v30 = vld [vmem:[%s1 + $0x90] sm:$0xff]
  %v31 = vld [vmem:[%s1 + $0x98] sm:$0xff]
  %v32 = vld [vmem:[%s1 + $0xa0] sm:$0xff]
  %v33 = vld [vmem:[%s1 + $0xa8] sm:$0xff]
  %v34 = vld [vmem:[%s1 + $0xb0] sm:$0xff]
  %v35 = vld [vmem:[%s1 + $0xb8] sm:$0xff]
  %v36 = vld [vmem:[%s1 + $0xc0] sm:$0xff]
  %v37 = vld [vmem:[%s1 + $0xc8] sm:$0xff]
  %v38 = vld [vmem:[%s1 + $0xd0] sm:$0xff]
  %v39 = vld [vmem:[%s1 + $0xd8] sm:$0xff]
  %v40 = vld [vmem:[%s1 + $0xe0] sm:$0xff]
  %v41 = vld [vmem:[%s1 + $0xe8] sm:$0xff]
  %v42 = vld [vmem:[%s1 + $0xf0] sm:$0xff]
  %v43 = vld [vmem:[%s1 + $0xf8] sm:$0xff]
  %v45 = vunpack.c.l.b16 %v11
  %v46 = vunpack.c.h.b16 %v11
  %v47 = vpack.c.b16 %v45, %v45
  %v48 = vpack.c.b16 %v46, %v46
  %v83 = vunpack.c.l.b16 %v12
  %v84 = vunpack.c.h.b16 %v12
  %v85 = vunpack.c.l.b16 %v13
  %v86 = vunpack.c.h.b16 %v13
  %v87 = vunpack.c.l.b16 %v14
  %v88 = vunpack.c.h.b16 %v14
  %v89 = vunpack.c.l.b16 %v15
  %v90 = vunpack.c.h.b16 %v15
  %v91 = vunpack.c.l.b16 %v16
  %v92 = vunpack.c.h.b16 %v16
  %v93 = vunpack.c.l.b16 %v17
  %v94 = vunpack.c.h.b16 %v17
  %v95 = vunpack.c.l.b16 %v18
  %v96 = vunpack.c.h.b16 %v18
  %v97 = vunpack.c.l.b16 %v19
  %v98 = vunpack.c.h.b16 %v19
  %v99 = vunpack.c.l.b16 %v20
  %v100 = vunpack.c.h.b16 %v20
  %v101 = vunpack.c.l.b16 %v21
  %v102 = vunpack.c.h.b16 %v21
  %v103 = vunpack.c.l.b16 %v22
  %v104 = vunpack.c.h.b16 %v22
  %v105 = vunpack.c.l.b16 %v23
  %v106 = vunpack.c.h.b16 %v23
  %v107 = vunpack.c.l.b16 %v24
  %v108 = vunpack.c.h.b16 %v24
  %v109 = vunpack.c.l.b16 %v25
  %v110 = vunpack.c.h.b16 %v25
  %v111 = vunpack.c.l.b16 %v26
  %v112 = vunpack.c.h.b16 %v26
  %v113 = vunpack.c.l.b16 %v27
  %v114 = vunpack.c.h.b16 %v27
  %v115 = vunpack.c.l.b16 %v28
  %v116 = vunpack.c.h.b16 %v28
  %v117 = vunpack.c.l.b16 %v29
  %v118 = vunpack.c.h.b16 %v29
  %v119 = vunpack.c.l.b16 %v30
  %v120 = vunpack.c.h.b16 %v30
  %v121 = vunpack.c.l.b16 %v31
  %v122 = vunpack.c.h.b16 %v31
  %v123 = vunpack.c.l.b16 %v32
  %v124 = vunpack.c.h.b16 %v32
  %v125 = vunpack.c.l.b16 %v33
  %v126 = vunpack.c.h.b16 %v33
  %v127 = vunpack.c.l.b16 %v34
  %v128 = vunpack.c.h.b16 %v34
  %v129 = vunpack.c.l.b16 %v35
  %v130 = vunpack.c.h.b16 %v35
  %v131 = vunpack.c.l.b16 %v36
  %v132 = vunpack.c.h.b16 %v36
  %v133 = vunpack.c.l.b16 %v37
  %v134 = vunpack.c.h.b16 %v37
  %v135 = vunpack.c.l.b16 %v38
  %v136 = vunpack.c.h.b16 %v38
  %v137 = vunpack.c.l.b16 %v39
  %v138 = vunpack.c.h.b16 %v39
  %v139 = vunpack.c.l.b16 %v40
  %v140 = vunpack.c.h.b16 %v40
  %v141 = vunpack.c.l.b16 %v41
  %v142 = vunpack.c.h.b16 %v41
  %v143 = vunpack.c.l.b16 %v42
  %v144 = vunpack.c.h.b16 %v42
  %v145 = vunpack.c.l.b16 %v43
  %v146 = vunpack.c.h.b16 %v43
  %v147 = vpack.c.b16 %v85, %v83
  %v148 = vpack.c.b16 %v86, %v84
  %v149 = vpack.c.b16 %v89, %v87
  %v150 = vpack.c.b16 %v90, %v88
  %v151 = vpack.c.b16 %v93, %v91
  %v152 = vpack.c.b16 %v94, %v92
  %v153 = vpack.c.b16 %v97, %v95
  %v154 = vpack.c.b16 %v98, %v96
  %v155 = vpack.c.b16 %v101, %v99
  %v156 = vpack.c.b16 %v102, %v100
  %v157 = vpack.c.b16 %v105, %v103
  %v158 = vpack.c.b16 %v106, %v104
  %v159 = vpack.c.b16 %v109, %v107
  %v160 = vpack.c.b16 %v110, %v108
  %v161 = vpack.c.b16 %v113, %v111
  %v162 = vpack.c.b16 %v114, %v112
  %v163 = vpack.c.b16 %v117, %v115
  %v164 = vpack.c.b16 %v118, %v116
  %v165 = vpack.c.b16 %v121, %v119
  %v166 = vpack.c.b16 %v122, %v120
  %v167 = vpack.c.b16 %v125, %v123
  %v168 = vpack.c.b16 %v126, %v124
  %v169 = vpack.c.b16 %v129, %v127
  %v170 = vpack.c.b16 %v130, %v128
  %v171 = vpack.c.b16 %v133, %v131
  %v172 = vpack.c.b16 %v134, %v132
  %v173 = vpack.c.b16 %v137, %v135
  %v174 = vpack.c.b16 %v138, %v136
  %v175 = vpack.c.b16 %v141, %v139
  %v176 = vpack.c.b16 %v142, %v140
  %v177 = vpack.c.b16 %v145, %v143
  %v178 = vpack.c.b16 %v146, %v144
  %211 = vmatprep.subr.bf16.mxu0 %v162
  %212 = vmatpush1.bf16.msra.mxu0 %v161
  %213 = vmatprep.subr.bf16.mxu0 %v160
  %214 = vmatpush1.bf16.msra.mxu0 %v159
  %215 = vmatprep.subr.bf16.mxu0 %v158
  %216 = vmatpush1.bf16.msra.mxu0 %v157
  %217 = vmatprep.subr.bf16.mxu0 %v156
  %218 = vmatpush1.bf16.msra.mxu0 %v155
  %219 = vmatprep.subr.bf16.mxu0 %v154
  %220 = vmatpush1.bf16.msra.mxu0 %v153
  %221 = vmatprep.subr.bf16.mxu0 %v152
  %222 = vmatpush1.bf16.msra.mxu0 %v151
  %223 = vmatprep.subr.bf16.mxu0 %v150
  %224 = vmatpush1.bf16.msra.mxu0 %v149
  %225 = vmatprep.subr.bf16.mxu0 %v148
  %226 = vmatpush1.bf16.msra.mxu0 %v147
  %227 = vmatprep.subr.bf16.mxu0 %v178
  %228 = vmatpush2.bf16.msra.mxu0 %v177
  %229 = vmatprep.subr.bf16.mxu0 %v176
  %230 = vmatpush2.bf16.msra.mxu0 %v175
  %231 = vmatprep.subr.bf16.mxu0 %v174
  %232 = vmatpush2.bf16.msra.mxu0 %v173
  %233 = vmatprep.subr.bf16.mxu0 %v172
  %234 = vmatpush2.bf16.msra.mxu0 %v171
  %235 = vmatprep.subr.bf16.mxu0 %v170
  %236 = vmatpush2.bf16.msra.mxu0 %v169
  %237 = vmatprep.subr.bf16.mxu0 %v168
  %238 = vmatpush2.bf16.msra.mxu0 %v167
  %239 = vmatprep.subr.bf16.mxu0 %v166
  %240 = vmatpush2.bf16.msra.mxu0 %v165
  %241 = vmatprep.subr.bf16.mxu0 %v164
  %242 = vmatpush2.bf16.msra.mxu0 %v163
  %243 = vmatprep.mubr.bf16.mxu0 %v48
  %244 = vmatmul.mubr.bf16.gmra.mxu0 %v47
  %v245 = vpop.f32.mrf.mxu0
  %v246 = vadd.f32 0.0, %v245
  %v247 = vpop.f32.mrf.mxu0
  %v248 = vadd.f32 0.0, %v247
  %v249 = vpop.f32.mrf.mxu0
  %v250 = vpop.f32.mrf.mxu0
  %251 = vdwg.mxu0
  %v252 = vsub.f32 %v246, 1.0
  %v253 = vsub.f32 %v248, 1.0
  %254 = vst [vmem:[%s2] sm:$0xff] %v252
  %255 = vst [vmem:[%s2 + $0x8] sm:$0xff] %v253
  // Predicated region
  $region10: #{forward.1} parent=0 // pred_check
    _
  $region11: #{forward.1} parent=0 // pred_check_branch
    %257 = sbr.rel (0) target = $region13
  $region12: #{forward.1} parent=0 // pred_region
    _
  $region13: #{forward.1} parent=0 // pred_fallthru
    _
  // Predicated region
  $region14: #{forward.1} parent=0 // pred_check
    _
  $region15: #{forward.1} parent=0 // pred_check_branch
    %259 = sbr.rel (0) target = $region17
  $region16: #{forward.1} parent=0 // pred_region
    _
  $region17: #{forward.1} parent=0 // pred_fallthru
    _

</llo_original>
